<compile_context>
chip_gen: v6e
topology: v6e:2x2x1
jax: 0.10.0
libtpu: 0.0.40
codegen_flags: <defaults>
</compile_context>

<pallas_src>
import jax
import jax.numpy as jnp
from jax.experimental import pallas as pl
from jax.experimental.pallas import tpu as pltpu


def _round_up(x: int, m: int) -> int:
    return ((x + m - 1) // m) * m


def _vmem_capacity_bytes() -> int:
    """Per-core VMEM capacity; conservative (v7x) fallback if query fails."""
    try:
        info = pltpu.get_tpu_info()
        cap = getattr(info, "vmem_capacity_bytes", None)
        if cap:
            return int(cap)
    except Exception:
        pass
    return 64 * 1024 * 1024


def _tile_vmem_need(tm, tn, tk, in_sz, out_sz):
    # double-buffered x/w/bias input tiles + double-buffered output tile
    # + one f32 accumulator tile.
    return (2 * (tm * tk + tk * tn) * in_sz
            + 2 * tn * 4
            + 2 * tm * tn * out_sz
            + tm * tn * 4)


# ----------------------------- kernels --------------------------------------

def _mlp_head_kernel_single(x_ref, w_ref, b_ref, o_ref):
    """Single-K fast path: whole contraction in one tile; no accumulator RMW."""
    o_ref[...] = (
        jnp.dot(x_ref[...], w_ref[...], preferred_element_type=jnp.float32)
        + b_ref[...]
    ).astype(o_ref.dtype)


def _mlp_head_kernel_acc(x_ref, w_ref, b_ref, o_ref, acc_ref):
    """Tiled contraction over H with an f32 VMEM accumulator (K innermost)."""
    k = pl.program_id(2)

    @pl.when(k == 0)
    def _():
        acc_ref[...] = jnp.zeros_like(acc_ref)

    acc_ref[...] += jnp.dot(x_ref[...], w_ref[...],
                            preferred_element_type=jnp.float32)

    @pl.when(k == pl.num_programs(2) - 1)
    def _():
        o_ref[...] = (acc_ref[...] + b_ref[...]).astype(o_ref.dtype)


# ------------------------- parameter prep (hoisted) -------------------------

def prepare_head_params(weight, bias, *, compute_dtype=None, tn=None, tk=None,
                        batch_hint=128, out_dtype=jnp.float32):
    """One-time parameter prep — call at load time, NOT per forward.

    weight: (L, H) in PyTorch nn.Linear layout; bias: (L,).
    Returns a dict holding the zero-padded, pre-cast, pre-transposed weight
    (Hp, Lp), the padded f32 bias (1, Lp), and the tile sizes used per call.
    bf16 compute_dtype is worthwhile on all of v5e/v6e/v7x (weight-BW bound).
    """
    L, H = weight.shape
    assert bias.shape == (L,)
    cdt = jnp.dtype(compute_dtype) if compute_dtype is not None else jnp.dtype(weight.dtype)
    odt = jnp.dtype(out_dtype)
    in_sz, out_sz = cdt.itemsize, odt.itemsize
    sub = 16 if in_sz == 2 else 8

    Lp0 = _round_up(L, 128)
    Hp0 = _round_up(H, 128)

    cap = _vmem_capacity_bytes()
    budget = int(0.7 * cap)

    if tn is None:
        tn = min(Lp0, 512)
        # Keep >= 2 output-column blocks when the label dim allows it so the
        # two v7x TensorCores both get a "parallel" block even when tm covers
        # the whole batch (costs ~nothing on 1-TC chips).
        if Lp0 >= 256:
            tn = min(tn, (Lp0 // 2) // 128 * 128)
    else:
        tn = _round_up(int(tn), 128)
    if tk is None:
        tk = min(Hp0, 2048 if in_sz == 2 else 1024)
    else:
        tk = _round_up(int(tk), 128)

    tm_hint = max(sub, _round_up(int(batch_hint), sub))
    while _tile_vmem_need(tm_hint, tn, tk, in_sz, out_sz) > budget and tk > 128:
        tk = max(128, (tk // 2) // 128 * 128)
    while _tile_vmem_need(tm_hint, tn, tk, in_sz, out_sz) > budget and tn > 128:
        tn = max(128, (tn // 2) // 128 * 128)

    Lp = _round_up(L, tn)
    Hp = _round_up(H, tk)

    # Zero-padded H rows contribute 0 to the dot; padded L columns are sliced
    # off after the call. Transpose happens ONCE here (static weight), so the
    # kernel runs a plain NN dot with no per-step XLU transpose.
    w_t = jnp.pad(weight, ((0, Lp - L), (0, Hp - H))).T.astype(cdt)
    b = jnp.pad(bias, (0, Lp - L)).reshape(1, Lp).astype(jnp.float32)

    return dict(w_t=w_t, b=b, L=L, H=H, tn=tn, tk=tk,
                compute_dtype=cdt, out_dtype=odt)


# ------------------------------ per-call apply -------------------------------

def mlp_head_apply(features, params):
    """Forward pass: (B, H) features -> (B, L) logits, using prepped params."""
    B, H = features.shape
    assert H == params["H"], "hidden size mismatch with prepared params"
    cdt = params["compute_dtype"]
    odt = params["out_dtype"]
    w_t, b = params["w_t"], params["b"]
    Hp, Lp = w_t.shape
    tn, tk = params["tn"], params["tk"]
    L = params["L"]

    in_sz, out_sz = jnp.dtype(cdt).itemsize, jnp.dtype(odt).itemsize
    sub = 16 if in_sz == 2 else 8

    cap = _vmem_capacity_bytes()
    budget = int(0.7 * cap)

    # tm covers the whole padded batch when it fits VMEM: the weight is then
    # streamed from HBM exactly once per call (each extra i block would cost a
    # full L*H pass over HBM).
    tm = _round_up(B, sub)
    while tm > sub and _tile_vmem_need(tm, tn, tk, in_sz, out_sz) > budget:
        tm = max(sub, _round_up(tm // 2, sub))
    Bp = _round_up(B, tm)

    # The only per-call layout work: pad/cast the (small) feature matrix.
    x = jnp.pad(features, ((0, Bp - B), (0, Hp - H))).astype(cdt)

    need = _tile_vmem_need(tm, tn, tk, in_sz, out_sz)
    vmem_limit = int(min(int(0.85 * cap), max(2 * need, 16 * 1024 * 1024)))
    vmem_limit = max(vmem_limit, need)

    n_i, n_j, n_k = Bp // tm, Lp // tn, Hp // tk

    if n_k == 1:
        # Whole H in one K tile: skip accumulator init / read-modify-write.
        out = pl.pallas_call(
            _mlp_head_kernel_single,
            out_shape=jax.ShapeDtypeStruct((Bp, Lp), odt),
            grid_spec=pltpu.PrefetchScalarGridSpec(
                num_scalar_prefetch=0,
                grid=(n_i, n_j),
                in_specs=[
                    pl.BlockSpec((tm, Hp), lambda i, j: (i, 0)),   # features
                    pl.BlockSpec((Hp, tn), lambda i, j: (0, j)),   # weight (H, L)
                    pl.BlockSpec((1, tn), lambda i, j: (0, j)),    # bias (f32)
                ],
                out_specs=pl.BlockSpec((tm, tn), lambda i, j: (i, j)),
            ),
            compiler_params=pltpu.CompilerParams(
                dimension_semantics=("parallel", "parallel"),
                vmem_limit_bytes=vmem_limit,
            ),
        )(x, w_t, b)
    else:
        out = pl.pallas_call(
            _mlp_head_kernel_acc,
            out_shape=jax.ShapeDtypeStruct((Bp, Lp), odt),
            grid_spec=pltpu.PrefetchScalarGridSpec(
                num_scalar_prefetch=0,
                grid=(n_i, n_j, n_k),
                in_specs=[
                    pl.BlockSpec((tm, tk), lambda i, j, k: (i, k)),  # features
                    pl.BlockSpec((tk, tn), lambda i, j, k: (k, j)),  # weight (H, L)
                    pl.BlockSpec((1, tn), lambda i, j, k: (0, j)),   # bias (f32)
                ],
                out_specs=pl.BlockSpec((tm, tn), lambda i, j, k: (i, j)),
                scratch_shapes=[pltpu.VMEM((tm, tn), jnp.float32)],
            ),
            compiler_params=pltpu.CompilerParams(
                dimension_semantics=("parallel", "parallel", "arbitrary"),
                vmem_limit_bytes=vmem_limit,
            ),
        )(x, w_t, b)

    return out[:B, :L]


def multilabel_mlp_layer(features, weight, bias, *, compute_dtype=None,
                         tn=None, tk=None):
    """One-shot convenience (prep + apply). For production, call
    prepare_head_params once at parameter-load time and mlp_head_apply per
    forward so the weight pad/cast/transpose is not on the hot path."""
    params = prepare_head_params(weight, bias, compute_dtype=compute_dtype,
                                 tn=tn, tk=tk, batch_hint=features.shape[0],
                                 out_dtype=features.dtype)
    return mlp_head_apply(features, params)


if __name__ == "__main__":
    key = jax.random.PRNGKey(0)
    k_x, k_w, k_b, k_x2, k_w2, k_b2 = jax.random.split(key, 6)

    # Shapes consistent with the module: batch=2, hidden_size=32, num_labels=8.
    B, H, L = 2, 32, 8
    features = jax.random.normal(k_x, (B, H), dtype=jnp.float32)
    weight = jax.random.normal(k_w, (L, H), dtype=jnp.float32) * 0.02  # (L, H)
    bias = jax.random.normal(k_b, (L,), dtype=jnp.float32) * 0.02      # (L,)
    ref = features @ weight.T + bias

    # f32 path (single-K fast path).
    out = jax.block_until_ready(multilabel_mlp_layer(features, weight, bias))
    assert out.shape == (B, L)
    assert jnp.allclose(out, ref, atol=1e-5, rtol=1e-5)

    # bf16 operand path (worthwhile on v5e/v6e/v7x); f32 accumulation + bias.
    out_bf16 = jax.block_until_ready(
        multilabel_mlp_layer(features, weight, bias, compute_dtype=jnp.bfloat16))
    assert jnp.allclose(out_bf16, ref, atol=2e-2, rtol=2e-2)

    # Exercise the K-accumulator path (forced small tk) with hoisted prep.
    B2, H2, L2 = 4, 512, 40
    features2 = jax.random.normal(k_x2, (B2, H2), dtype=jnp.float32)
    weight2 = jax.random.normal(k_w2, (L2, H2), dtype=jnp.float32) * 0.02
    bias2 = jax.random.normal(k_b2, (L2,), dtype=jnp.float32) * 0.02
    ref2 = features2 @ weight2.T + bias2
    params2 = prepare_head_params(weight2, bias2, tk=128, batch_hint=B2,
                                  out_dtype=features2.dtype)
    out2 = jax.block_until_ready(mlp_head_apply(features2, params2))
    assert out2.shape == (B2, L2)
    assert jnp.allclose(out2, ref2, atol=1e-4, rtol=1e-4)

    print("KERNEL_OK")
</pallas_src>

<mosaic_0001>
module attributes {stable_mosaic.version = 11 : i64} {
  func.func @_mlp_head_kernel_single(%arg0: i32, %arg1: i32, %arg2: memref<8x128xf32, #tpu.memory_space<vmem>>, %arg3: memref<128x128xf32, #tpu.memory_space<vmem>>, %arg4: memref<1x128xf32, #tpu.memory_space<vmem>>, %arg5: memref<8x128xf32, #tpu.memory_space<vmem>>) attributes {dimension_semantics = [#tpu.dimension_semantics<parallel>, #tpu.dimension_semantics<parallel>], iteration_bounds = array<i64: 1, 1>, scalar_prefetch = 0 : i64, scratch_operands = 0 : i64, tpu.core_type = #tpu.core_type<tc>, window_params = [{transform_indices = @transform_0, window_bounds = array<i64: 8, 128>}, {transform_indices = @transform_1, window_bounds = array<i64: 128, 128>}, {transform_indices = @transform_2, window_bounds = array<i64: 1, 128>}, {transform_indices = @transform_3, window_bounds = array<i64: 8, 128>}]} {
    %c0 = arith.constant 0 : index
    %c0_0 = arith.constant 0 : index
    %0 = vector.load %arg2[%c0, %c0_0] : memref<8x128xf32, #tpu.memory_space<vmem>>, vector<8x128xf32>
    %c0_1 = arith.constant 0 : index
    %c0_2 = arith.constant 0 : index
    %1 = vector.load %arg3[%c0_1, %c0_2] : memref<128x128xf32, #tpu.memory_space<vmem>>, vector<128x128xf32>
    %cst = arith.constant dense<0.000000e+00> : vector<8x128xf32>
    %2 = tpu.matmul %0, %1, %cst {dimension_numbers = #tpu.dot_dimension_numbers<[1], [0], [0], [1], [0, 0, 1, 1], [], []>} : vector<8x128xf32>, vector<128x128xf32>, vector<8x128xf32> -> vector<8x128xf32>
    %c0_3 = arith.constant 0 : index
    %c0_4 = arith.constant 0 : index
    %3 = vector.load %arg4[%c0_3, %c0_4] : memref<1x128xf32, #tpu.memory_space<vmem>>, vector<1x128xf32>
    %4 = vector.broadcast %3 : vector<1x128xf32> to vector<8x128xf32>
    %5 = arith.addf %2, %4 : vector<8x128xf32>
    %c0_5 = arith.constant 0 : index
    %c0_6 = arith.constant 0 : index
    %6 = vector.load %arg5[%c0_5, %c0_6] : memref<8x128xf32, #tpu.memory_space<vmem>>, vector<8x128xf32>
    tpu.vector_store %arg5[%c0_5, %c0_6], %5 {strides = array<i32>} : memref<8x128xf32, #tpu.memory_space<vmem>>, vector<8x128xf32>,
    return
  }
  func.func @transform_0(%arg0: i32, %arg1: i32) -> (i32, i32) {
    %c0_i32 = arith.constant 0 : i32
    %c0_i32_0 = arith.constant 0 : i32
    return %arg0, %c0_i32 : i32, i32
  }
  func.func @transform_1(%arg0: i32, %arg1: i32) -> (i32, i32) {
    %c0_i32 = arith.constant 0 : i32
    %c0_i32_0 = arith.constant 0 : i32
    return %c0_i32, %arg1 : i32, i32
  }
  func.func @transform_2(%arg0: i32, %arg1: i32) -> (i32, i32) {
    %c0_i32 = arith.constant 0 : i32
    %c0_i32_0 = arith.constant 0 : i32
    return %c0_i32, %arg1 : i32, i32
  }
  func.func @transform_3(%arg0: i32, %arg1: i32) -> (i32, i32) {
    %c0_i32 = arith.constant 0 : i32
    return %arg0, %arg1 : i32, i32
  }
}

</mosaic_0001>

<llo_original>
// kernel: tpu_custom_call.1
$region0: #{tpu_custom_call.1}
  #allocation0 [shape = 'u32[]', space=smem, size = 0x4, offset = 0x4, fixed_abs, tag = 'smem constant byte address 0x4 - core index']
  #allocation1 [shape = 'u32[144,128]{1,0:T(1,128)}', space=vmem, size = 0x12000, scoped, tag = 'internal scratch']
  %s0 = inlined_call_operand.hbm [shape: f32[8,128], index: 0, kind: input, shape index: {}]
  %s1 = inlined_call_operand.hbm [shape: f32[128,128], index: 1, kind: input, shape index: {}]
  %s2 = inlined_call_operand.vmem [shape: f32[1,128], index: 2, kind: input, shape index: {}]
  %s3 = inlined_call_operand.hbm [shape: f32[8,128], index: 3, kind: output, shape index: {}]
  %s4 = sld [smem:[#allocation0]]
  $region30: #{tpu_custom_call.1} parent=0
    _
  %s6 = ssub.s32 1, %s4
  %s7 = scalar_select 0, %s6, %s4
  $region1: #{tpu_custom_call.1} parent=0
    #allocation2 [shape = 'u8[4096]{0}', space=vmem, size = 0x1000, scoped, tag = 'input window, operand 0, single buffered']
    #allocation3 [shape = 's32[1]{0}', space=sflag, size = 0x4, scoped, tag = 'scoped memory for tpu_custom_call.1']
    #allocation4 [shape = 's32[1]{0}', space=sflag, size = 0x4, scoped, tag = 'scoped memory for tpu_custom_call.1']
    #allocation5 [shape = 'u8[65536]{0}', space=vmem, size = 0x10000, scoped, tag = 'input window, operand 1, single buffered']
    #allocation6 [shape = 's32[1]{0}', space=sflag, size = 0x4, scoped, tag = 'scoped memory for tpu_custom_call.1']
    #allocation7 [shape = 'u8[4096]{0}', space=vmem, size = 0x1000, scoped, tag = 'output window, operand 0, single buffered']
    %8 = vsyncpa [#allocation3], 0
    %9 = vsyncpa [#allocation6], 0
    %10 = vsyncpa [#allocation4], 0
    // Predicated region
    $region2: #{tpu_custom_call.1} parent=1 // pred_check
      _
    $region3: #{tpu_custom_call.1} parent=1 // pred_check_branch
      %12 = sbr.rel (0) target = $region5
    $region4: #{tpu_custom_call.1} parent=1 // pred_region
      %s14 = ssub.s32 128, 128
      %15 = vsyncadd [#allocation3], %s14
      %s17 = sshll.u32 [#allocation2], 4
      %s18 = int_to_ptr.vmem [resolvable:$true] %s17
      %20 = dma.hbm_to_vmem [thread:$0]  %s0, 128, %s18, [#allocation3]
    $region5: #{tpu_custom_call.1} parent=1 // pred_fallthru
      _
    // Predicated region
    $region6: #{tpu_custom_call.1} parent=1 // pred_check
      _
    $region7: #{tpu_custom_call.1} parent=1 // pred_check_branch
      %22 = sbr.rel (0) target = $region9
    $region8: #{tpu_custom_call.1} parent=1 // pred_region
      %s24 = ssub.s32 2048, 2048
      %25 = vsyncadd [#allocation6], %s24
      %s26 = sshll.u32 [#allocation5], 4
      %s27 = int_to_ptr.vmem [resolvable:$true] %s26
      %32 = dma.hbm_to_vmem [thread:$0]  %s1, 2048, %s27, [#allocation6], 128, 128, 8
    $region9: #{tpu_custom_call.1} parent=1 // pred_fallthru
      _
    // Predicated region
    $region10: #{tpu_custom_call.1} parent=1 // pred_check
      _
    $region11: #{tpu_custom_call.1} parent=1 // pred_check_branch
      %34 = sbr.rel (0) target = $region13
    $region12: #{tpu_custom_call.1} parent=1 // pred_region
      _
    $region13: #{tpu_custom_call.1} parent=1 // pred_fallthru
      _
    // Predicated region
    $region14: #{tpu_custom_call.1} parent=1 // pred_check
      _
    $region15: #{tpu_custom_call.1} parent=1 // pred_check_branch
      %36 = sbr.rel (0) target = $region17
    $region16: #{tpu_custom_call.1} parent=1 // pred_region
      %37 = dma.done [#allocation3], 128
    $region17: #{tpu_custom_call.1} parent=1 // pred_fallthru
      _
    // Predicated region
    $region18: #{tpu_custom_call.1} parent=1 // pred_check
      _
    $region19: #{tpu_custom_call.1} parent=1 // pred_check_branch
      %39 = sbr.rel (0) target = $region21
    $region20: #{tpu_custom_call.1} parent=1 // pred_region
      %40 = dma.done [#allocation6], 2048
    $region21: #{tpu_custom_call.1} parent=1 // pred_fallthru
      _
    %v41 = vld [vmem:[#allocation2] sm:$0xff]
    %v42 = vld [vmem:[#allocation5] sm:$0xff]
    %v43 = vld [vmem:[#allocation5 + $0x8] sm:$0xff]
    %v44 = vld [vmem:[#allocation5 + $0x10] sm:$0xff]
    %v45 = vld [vmem:[#allocation5 + $0x18] sm:$0xff]
    %v46 = vld [vmem:[#allocation5 + $0x20] sm:$0xff]
    %v47 = vld [vmem:[#allocation5 + $0x28] sm:$0xff]
    %v48 = vld [vmem:[#allocation5 + $0x30] sm:$0xff]
    %v49 = vld [vmem:[#allocation5 + $0x38] sm:$0xff]
    %v50 = vld [vmem:[#allocation5 + $0x40] sm:$0xff]
    %v51 = vld [vmem:[#allocation5 + $0x48] sm:$0xff]
    %v52 = vld [vmem:[#allocation5 + $0x50] sm:$0xff]
    %v53 = vld [vmem:[#allocation5 + $0x58] sm:$0xff]
    %v54 = vld [vmem:[#allocation5 + $0x60] sm:$0xff]
    %v55 = vld [vmem:[#allocation5 + $0x68] sm:$0xff]
    %v56 = vld [vmem:[#allocation5 + $0x70] sm:$0xff]
    %v57 = vld [vmem:[#allocation5 + $0x78] sm:$0xff]
    %v58 = vld [vmem:[%s2] sm:$0x1]
    %v60 = vlaneseq
    %v61 = vshrl.u32 %v60, 7
    %v62 = vsub.s32 0, %v61
    %v63 = vrot.slane %v58, %v62
    %65 = vmatprep.subr.mxu0 0.0
    %66 = vmatpush1.msra.mxu0 %v57
    %67 = vmatprep.subr.mxu0 0.0
    %68 = vmatpush1.msra.mxu0 %v56
    %69 = vmatprep.subr.mxu0 0.0
    %70 = vmatpush1.msra.mxu0 %v55
    %71 = vmatprep.subr.mxu0 0.0
    %72 = vmatpush1.msra.mxu0 %v54
    %73 = vmatprep.subr.mxu0 0.0
    %74 = vmatpush1.msra.mxu0 %v53
    %75 = vmatprep.subr.mxu0 0.0
    %76 = vmatpush1.msra.mxu0 %v52
    %77 = vmatprep.subr.mxu0 0.0
    %78 = vmatpush1.msra.mxu0 %v51
    %79 = vmatprep.subr.mxu0 0.0
    %80 = vmatpush1.msra.mxu0 %v50
    %81 = vmatprep.subr.mxu0 0.0
    %82 = vmatpush1.msra.mxu0 %v49
    %83 = vmatprep.subr.mxu0 0.0
    %84 = vmatpush1.msra.mxu0 %v48
    %85 = vmatprep.subr.mxu0 0.0
    %86 = vmatpush1.msra.mxu0 %v47
    %87 = vmatprep.subr.mxu0 0.0
    %88 = vmatpush1.msra.mxu0 %v46
    %89 = vmatprep.subr.mxu0 0.0
    %90 = vmatpush1.msra.mxu0 %v45
    %91 = vmatprep.subr.mxu0 0.0
    %92 = vmatpush1.msra.mxu0 %v44
    %93 = vmatprep.subr.mxu0 0.0
    %94 = vmatpush1.msra.mxu0 %v43
    %95 = vmatprep.subr.mxu0 0.0
    %96 = vmatpush1.msra.mxu0 %v42
    %97 = vmatprep.subr.mxu0 0.0
    %98 = vmatpush2.msra.mxu0 0.0
    %99 = vmatprep.subr.mxu0 0.0
    %100 = vmatpush2.msra.mxu0 0.0
    %101 = vmatprep.subr.mxu0 0.0
    %102 = vmatpush2.msra.mxu0 0.0
    %103 = vmatprep.subr.mxu0 0.0
    %104 = vmatpush2.msra.mxu0 0.0
    %105 = vmatprep.subr.mxu0 0.0
    %106 = vmatpush2.msra.mxu0 0.0
    %107 = vmatprep.subr.mxu0 0.0
    %108 = vmatpush2.msra.mxu0 0.0
    %109 = vmatprep.subr.mxu0 0.0
    %110 = vmatpush2.msra.mxu0 0.0
    %111 = vmatprep.subr.mxu0 0.0
    %112 = vmatpush2.msra.mxu0 0.0
    %113 = vmatprep.subr.mxu0 0.0
    %114 = vmatpush2.msra.mxu0 0.0
    %115 = vmatprep.subr.mxu0 0.0
    %116 = vmatpush2.msra.mxu0 0.0
    %117 = vmatprep.subr.mxu0 0.0
    %118 = vmatpush2.msra.mxu0 0.0
    %119 = vmatprep.subr.mxu0 0.0
    %120 = vmatpush2.msra.mxu0 0.0
    %121 = vmatprep.subr.mxu0 0.0
    %122 = vmatpush2.msra.mxu0 0.0
    %123 = vmatprep.subr.mxu0 0.0
    %124 = vmatpush2.msra.mxu0 0.0
    %125 = vmatprep.subr.mxu0 0.0
    %126 = vmatpush2.msra.mxu0 0.0
    %127 = vmatprep.subr.mxu0 0.0
    %128 = vmatpush2.msra.mxu0 0.0
    %129 = vmatprep.mubr.f32.mxu0 0.0
    %130 = vmatmul.mubr.f32.gmra.mxu0 %v41
    %v131 = vpop.f32.mrf.mxu0
    %v132 = vadd.f32 %v63, %v131
    %v133 = vpop.f32.mrf.mxu0
    %134 = vdwg.mxu0
    %135 = vst [vmem:[#allocation7] sm:$0xff] %v132
    // Predicated region
    $region22: #{tpu_custom_call.1} parent=1 // pred_check
      _
    $region23: #{tpu_custom_call.1} parent=1 // pred_check_branch
      %137 = sbr.rel (0) target = $region25
    $region24: #{tpu_custom_call.1} parent=1 // pred_region
      %s139 = ssub.s32 128, 128
      %140 = vsyncadd [#allocation4], %s139
      %s142 = sshll.u32 [#allocation7], 4
      %s143 = int_to_ptr.vmem [resolvable:$true] %s142
      %145 = dma.vmem_to_hbm [thread:$0]  %s143, 128, %s3, [#allocation4]
    $region25: #{tpu_custom_call.1} parent=1 // pred_fallthru
      _
    // Predicated region
    $region26: #{tpu_custom_call.1} parent=1 // pred_check
      _
    $region27: #{tpu_custom_call.1} parent=1 // pred_check_branch
      %147 = sbr.rel (0) target = $region29
    $region28: #{tpu_custom_call.1} parent=1 // pred_region
      %148 = dma.done [#allocation4], 128
    $region29: #{tpu_custom_call.1} parent=1 // pred_fallthru
      _
    %149 = vsyncpa [#allocation3], 1
    %150 = vsyncpa [#allocation6], 1
    %151 = vsyncpa [#allocation4], 1

</llo_original>
